<compile_context>
chip_gen: v7x
topology: tpu7x:2x2x1
jax: 0.10.0
libtpu: 0.0.40
codegen_flags: <defaults>
</compile_context>

<pallas_src>
import functools

import jax
import jax.numpy as jnp
from jax.experimental import pallas as pl
from jax.experimental.pallas import tpu as pltpu


# ---------------------------------------------------------------------------
# Helpers
# ---------------------------------------------------------------------------
def _round_up(v: int, m: int) -> int:
    return ((v + m - 1) // m) * m


def _largest_divisor_tile(total: int, cap: int, unit: int):
    """Largest multiple of `unit` that divides `total` and is <= cap (or None)."""
    t = (min(cap, total) // unit) * unit
    while t >= unit:
        if total % t == 0:
            return t
        t -= unit
    return None


def _vmem_budget():
    """Generation-aware (budget_for_tiles, vmem_limit_bytes)."""
    try:
        cap = int(pltpu.get_tpu_info().vmem_capacity_bytes)
    except Exception:
        cap = 64 * 1024 * 1024            # conservative: v7x per-TC VMEM
    limit = min(int(cap * 0.85), 100 * 1024 * 1024)   # v7x ~54MiB, v5e/v6e 100MiB
    budget = int(limit * 0.85)                        # headroom for compiler scratch
    return budget, limit


# ---------------------------------------------------------------------------
# Pallas kernel: logits = x @ W + b  (K-reduction on last grid axis),
#                optionally probs = sigmoid(logits) fused on the last K step.
#   x block      : (TM, TK)    batch tile x feature tile
#   w block      : (TK, N)     feature tile x full (small) output dim
#   b block      : (1, N)      resident
#   logits block : (TM, N)     f32, doubles as the accumulator (same block
#                              index across the K axis -> resident in VMEM)
#   probs block  : (TM, N)     optional, written only at the last K step
# ---------------------------------------------------------------------------
def _bernoulli_head_kernel(x_ref, w_ref, b_ref, *out_refs, n_k, with_probs):
    logits_ref = out_refs[0]
    k = pl.program_id(1)

    @pl.when(k == 0)
    def _init():
        logits_ref[...] = jnp.broadcast_to(b_ref[...], logits_ref.shape)

    logits_ref[...] += jnp.dot(
        x_ref[...], w_ref[...], preferred_element_type=jnp.float32
    )

    if with_probs:
        @pl.when(k == n_k - 1)
        def _finalize():
            out_refs[1][...] = jax.nn.sigmoid(logits_ref[...]).astype(
                out_refs[1].dtype
            )


def bernoulli_head(x, w_t, b, *, compute_dtype=jnp.float32, with_probs=False,
                   block_m=1024):
    """logits (and optionally probs) for a Bernoulli head via Pallas.

    x   : [B, num_inputs]
    w_t : [num_inputs, num_outputs]   (transposed nn.Linear weight)
    b   : [1, num_outputs]            float32
    Returns (logits, probs) with probs=None when with_probs=False.
    """
    B, K = x.shape
    Kw, N = w_t.shape
    assert Kw == K, (Kw, K)

    in_itemsize = jnp.dtype(compute_dtype).itemsize
    out_itemsize = 4
    n_outs = 2 if with_probs else 1

    vmem_budget, vmem_limit = _vmem_budget()

    # ---- K tiling (only when the double-buffered W block would not fit) ----
    w_full_bytes = 2 * K * N * in_itemsize
    if w_full_bytes <= vmem_budget // 2 or K <= 128:
        tk, nk, k_pad = K, 1, K
    else:
        tk_cap = max(128, ((vmem_budget // 2) // (2 * N * in_itemsize)) // 128 * 128)
        tk = _largest_divisor_tile(K, tk_cap, 128)
        if tk is None:                      # rare fallback: pad K with zeros
            tk = min(tk_cap, _round_up(K, 128))
        k_pad = _round_up(K, tk)
        nk = k_pad // tk

    # ---- batch tiling -------------------------------------------------------
    resident_bytes = 2 * (tk * N * in_itemsize) + 2 * (max(N, 128) * 4)   # W + b
    per_row_bytes = 2 * tk * in_itemsize + 2 * n_outs * N * out_itemsize  # x + outs
    tm_cap = max(8, (max(vmem_budget - resident_bytes, 0) // max(per_row_bytes, 1))
                 // 8 * 8)
    tm_cap = min(tm_cap, block_m)

    if B <= tm_cap:
        tm, nm, b_pad = B, 1, B             # single tile: block == full dim, no pad
    else:
        tm = _largest_divisor_tile(B, tm_cap, 8)
        if tm is None:                      # rare fallback: pad B with zeros
            tm = tm_cap
        b_pad = _round_up(B, tm)
        nm = b_pad // tm

    # ---- wrapper-side prep (pads only in the rare ragged fallbacks) --------
    x_p, w_p = x, w_t
    bias_p = b.reshape(1, N).astype(jnp.float32)
    if k_pad != K:
        x_p = jnp.pad(x_p, ((0, 0), (0, k_pad - K)))
        w_p = jnp.pad(w_p, ((0, k_pad - K), (0, 0)))
    if b_pad != B:
        x_p = jnp.pad(x_p, ((0, b_pad - B), (0, 0)))
    if x_p.dtype != jnp.dtype(compute_dtype):
        x_p = x_p.astype(compute_dtype)
    if w_p.dtype != jnp.dtype(compute_dtype):
        w_p = w_p.astype(compute_dtype)

    # ---- cost estimate with TRUE sizes --------------------------------------
    cost = pl.CostEstimate(
        flops=2 * B * K * N,
        transcendentals=(B * N) if with_probs else 0,
        bytes_accessed=(B * K * in_itemsize + K * N * in_itemsize + N * 4
                        + n_outs * B * N * out_itemsize),
    )

    out_shapes = [jax.ShapeDtypeStruct((b_pad, N), jnp.float32)]
    out_specs = [pl.BlockSpec((tm, N), lambda i, k: (i, 0))]
    if with_probs:
        out_shapes.append(jax.ShapeDtypeStruct((b_pad, N), jnp.float32))
        out_specs.append(pl.BlockSpec((tm, N), lambda i, k: (i, 0)))

    outs = pl.pallas_call(
        functools.partial(_bernoulli_head_kernel, n_k=nk, with_probs=with_probs),
        out_shape=tuple(out_shapes),
        grid_spec=pltpu.PrefetchScalarGridSpec(
            num_scalar_prefetch=0,
            grid=(nm, nk),
            in_specs=[
                pl.BlockSpec((tm, tk), lambda i, k: (i, k)),   # batch/K-tiled x
                pl.BlockSpec((tk, N), lambda i, k: (k, 0)),    # K-tiled W
                pl.BlockSpec((1, N), lambda i, k: (0, 0)),     # resident bias
            ],
            out_specs=out_specs,
        ),
        compiler_params=pltpu.CompilerParams(
            dimension_semantics=("parallel", "arbitrary"),
            vmem_limit_bytes=vmem_limit,
        ),
        cost_estimate=cost,
    )(x_p, w_p, bias_p)

    logits = outs[0]
    probs = outs[1] if with_probs else None
    if b_pad != B:                      # only in the rare padded fallback
        logits = logits[:B]
        if probs is not None:
            probs = probs[:B]
    return logits, probs


# ---------------------------------------------------------------------------
# FixedBernoulli distribution (thin JAX glue over kernel-produced outputs)
# ---------------------------------------------------------------------------
class FixedBernoulli:
    def __init__(self, logits, probs=None):
        self.logits = logits
        self._probs = probs             # kernel-fused sigmoid, if provided

    @property
    def probs(self):
        if self._probs is None:
            self._probs = jax.nn.sigmoid(self.logits)   # lazy, like PyTorch
        return self._probs

    def log_prob(self, actions):
        # Bernoulli log prob with logits:  a*l - softplus(l)
        a = actions.astype(self.logits.dtype)
        return a * self.logits - jax.nn.softplus(self.logits)

    def log_probs(self, actions):
        lp = self.log_prob(actions)
        lp = lp.reshape(actions.shape[0], -1).sum(-1)
        return lp[:, None]              # [B, 1] (matches PyTorch API)

    def entropy(self):
        l = self.logits
        ent = jax.nn.softplus(l) - l * self.probs
        return ent.sum(-1)              # [B]   (matches PyTorch API)

    def mode(self):
        return (self.probs > 0.5).astype(jnp.float32)


# ---------------------------------------------------------------------------
# Module: Bernoulli head with orthogonal-init weight, zero bias
# ---------------------------------------------------------------------------
class Bernoulli:
    def __init__(self, num_inputs, num_outputs, key, *,
                 compute_dtype=jnp.float32, fuse_probs=False):
        # Deterministic orthogonal init (matches nn.init.orthogonal_ semantics)
        a = jax.random.normal(key, (num_outputs, num_inputs), dtype=jnp.float32)
        q, r = jnp.linalg.qr(a.T)
        d = jnp.diag(r)
        sign = jnp.where(d == 0, 1.0, jnp.sign(d))
        q = q * sign[None, :]
        w = q.T                                               # [out, in]
        w_t = jnp.asarray(w.T, dtype=jnp.float32)             # [in, out]
        # Pre-cast once (avoids a per-call XLA pass over W in the bf16 path).
        if jnp.dtype(compute_dtype) != jnp.dtype(jnp.float32):
            w_t = w_t.astype(compute_dtype)
        self.w_t = w_t
        self.b = jnp.zeros((1, num_outputs), dtype=jnp.float32)
        self.compute_dtype = compute_dtype
        self.fuse_probs = fuse_probs

    def __call__(self, x):
        logits, probs = bernoulli_head(
            x, self.w_t, self.b,
            compute_dtype=self.compute_dtype,
            with_probs=self.fuse_probs,
        )
        return FixedBernoulli(logits=logits, probs=probs)


if __name__ == "__main__":
    key = jax.random.PRNGKey(0)
    k_w, k_x, k_a, k_x2 = jax.random.split(key, 4)

    batch, num_inputs, num_outputs = 4, 32, 8
    module = Bernoulli(num_inputs, num_outputs, k_w)
    x = jax.random.normal(k_x, (batch, num_inputs), dtype=jnp.float32)

    # --- default path: one output slab (logits), lazy probs -----------------
    dist = module(x)
    logits = jax.block_until_ready(dist.logits)
    ref_logits = x @ module.w_t + module.b
    assert jnp.allclose(logits, ref_logits, atol=1e-5, rtol=1e-5)

    probs = jax.block_until_ready(dist.probs)        # lazy sigmoid (plain JAX)
    assert jnp.allclose(probs, jax.nn.sigmoid(ref_logits), atol=1e-5, rtol=1e-5)

    # Distribution methods (plain-JAX glue on kernel outputs)
    actions = (jax.random.uniform(k_a, (batch, num_outputs)) > 0.5).astype(jnp.int32)
    lp = jax.block_until_ready(dist.log_probs(actions))
    ent = jax.block_until_ready(dist.entropy())
    mode = jax.block_until_ready(dist.mode())
    assert lp.shape == (batch, 1)
    assert ent.shape == (batch,)
    assert mode.shape == (batch, num_outputs)

    # --- fused-probs path (optional second output) --------------------------
    logits_f, probs_f = bernoulli_head(x, module.w_t, module.b, with_probs=True)
    jax.block_until_ready(probs_f)
    assert jnp.allclose(logits_f, ref_logits, atol=1e-5, rtol=1e-5)
    assert jnp.allclose(probs_f, jax.nn.sigmoid(ref_logits), atol=1e-5, rtol=1e-5)

    # --- multi-tile grid path (tm divides B -> no pad / no slice) -----------
    x2 = jax.random.normal(k_x2, (192, num_inputs), dtype=jnp.float32)
    logits2, _ = bernoulli_head(x2, module.w_t, module.b, block_m=64)
    jax.block_until_ready(logits2)
    ref2 = x2 @ module.w_t + module.b
    assert jnp.allclose(logits2, ref2, atol=1e-5, rtol=1e-5)

    # --- bf16 MXU path (perf option; looser tolerance) ----------------------
    module_bf16 = Bernoulli(num_inputs, num_outputs, k_w, compute_dtype=jnp.bfloat16)
    logits_bf16 = jax.block_until_ready(module_bf16(x).logits)
    assert jnp.allclose(logits_bf16, ref_logits, atol=5e-2, rtol=5e-2)

    print("KERNEL_OK")
</pallas_src>

<mosaic_0001>
module attributes {stable_mosaic.version = 11 : i64} {
  func.func @_bernoulli_head_kernel(%arg0: i32, %arg1: i32, %arg2: memref<4x32xf32, #tpu.memory_space<vmem>>, %arg3: memref<32x8xf32, #tpu.memory_space<vmem>>, %arg4: memref<1x8xf32, #tpu.memory_space<vmem>>, %arg5: memref<4x8xf32, #tpu.memory_space<vmem>>) attributes {dimension_semantics = [#tpu.dimension_semantics<parallel>, #tpu.dimension_semantics<arbitrary>], iteration_bounds = array<i64: 1, 1>, scalar_prefetch = 0 : i64, scratch_operands = 0 : i64, tpu.core_type = #tpu.core_type<tc>, window_params = [{transform_indices = @transform_0, window_bounds = array<i64: 4, 32>}, {transform_indices = @transform_1, window_bounds = array<i64: 32, 8>}, {pipeline_mode = #tpu.pipeline_mode<synchronous>, transform_indices = @transform_2, window_bounds = array<i64: 1, 8>}, {transform_indices = @transform_3, window_bounds = array<i64: 4, 8>}]} {
    %c0_i32 = arith.constant 0 : i32
    %0 = arith.cmpi eq, %arg1, %c0_i32 : i32
    %1 = arith.extui %0 : i1 to i32
    %c0_i32_0 = arith.constant 0 : i32
    %2 = arith.cmpi ne, %1, %c0_i32_0 : i32
    scf.if %2 {
      %c0_8 = arith.constant 0 : index
      %c0_9 = arith.constant 0 : index
      %9 = vector.load %arg4[%c0_8, %c0_9] : memref<1x8xf32, #tpu.memory_space<vmem>>, vector<1x8xf32>
      %10 = vector.shape_cast %9 : vector<1x8xf32> to vector<1x8xf32>
      %11 = vector.broadcast %10 : vector<1x8xf32> to vector<4x8xf32>
      %c0_10 = arith.constant 0 : index
      %c0_11 = arith.constant 0 : index
      %12 = vector.load %arg5[%c0_10, %c0_11] : memref<4x8xf32, #tpu.memory_space<vmem>>, vector<4x8xf32>
      tpu.vector_store %arg5[%c0_10, %c0_11], %11 {strides = array<i32>} : memref<4x8xf32, #tpu.memory_space<vmem>>, vector<4x8xf32>,
    } else {
    }
    %c0 = arith.constant 0 : index
    %c0_1 = arith.constant 0 : index
    %3 = vector.load %arg5[%c0, %c0_1] : memref<4x8xf32, #tpu.memory_space<vmem>>, vector<4x8xf32>
    %c0_2 = arith.constant 0 : index
    %c0_3 = arith.constant 0 : index
    %4 = vector.load %arg2[%c0_2, %c0_3] : memref<4x32xf32, #tpu.memory_space<vmem>>, vector<4x32xf32>
    %c0_4 = arith.constant 0 : index
    %c0_5 = arith.constant 0 : index
    %5 = vector.load %arg3[%c0_4, %c0_5] : memref<32x8xf32, #tpu.memory_space<vmem>>, vector<32x8xf32>
    %cst = arith.constant dense<0.000000e+00> : vector<4x8xf32>
    %6 = tpu.matmul %4, %5, %cst {dimension_numbers = #tpu.dot_dimension_numbers<[1], [0], [0], [1], [0, 0, 1, 1], [], []>} : vector<4x32xf32>, vector<32x8xf32>, vector<4x8xf32> -> vector<4x8xf32>
    %7 = arith.addf %3, %6 : vector<4x8xf32>
    %c0_6 = arith.constant 0 : index
    %c0_7 = arith.constant 0 : index
    %8 = vector.load %arg5[%c0_6, %c0_7] : memref<4x8xf32, #tpu.memory_space<vmem>>, vector<4x8xf32>
    tpu.vector_store %arg5[%c0_6, %c0_7], %7 {strides = array<i32>} : memref<4x8xf32, #tpu.memory_space<vmem>>, vector<4x8xf32>,
    return
  }
  func.func @transform_0(%arg0: i32, %arg1: i32) -> (i32, i32) {
    %c0_i32 = arith.constant 0 : i32
    return %arg0, %arg1 : i32, i32
  }
  func.func @transform_1(%arg0: i32, %arg1: i32) -> (i32, i32) {
    %c0_i32 = arith.constant 0 : i32
    %c0_i32_0 = arith.constant 0 : i32
    return %arg1, %c0_i32 : i32, i32
  }
  func.func @transform_2(%arg0: i32, %arg1: i32) -> (i32, i32) {
    %c0_i32 = arith.constant 0 : i32
    %c0_i32_0 = arith.constant 0 : i32
    %c0_i32_1 = arith.constant 0 : i32
    return %c0_i32, %c0_i32_0 : i32, i32
  }
  func.func @transform_3(%arg0: i32, %arg1: i32) -> (i32, i32) {
    %c0_i32 = arith.constant 0 : i32
    %c0_i32_0 = arith.constant 0 : i32
    return %arg0, %c0_i32 : i32, i32
  }
}

</mosaic_0001>

<llo_original>
// kernel: tpu_custom_call.1
$region0: #{tpu_custom_call.1}
  #allocation0 [shape = 'u32[]', space=smem, size = 0x4, offset = 0x4, fixed_abs, tag = 'smem constant byte address 0x4 - core index']
  #allocation1 [shape = 'u32[144,128]{1,0:T(1,128)}', space=vmem, size = 0x12000, scoped, tag = 'internal scratch']
  %s0 = inlined_call_operand.vmem [shape: f32[4,32], index: 0, kind: input, shape index: {}]
  %s1 = inlined_call_operand.vmem [shape: f32[32,8], index: 1, kind: input, shape index: {}]
  %s2 = inlined_call_operand.vmem [shape: f32[1,8], index: 2, kind: input, shape index: {}]
  %s3 = inlined_call_operand.hbm [shape: f32[4,8], index: 3, kind: output, shape index: {}]
  %s4 = sld [smem:[#allocation0]]
  $region26: #{tpu_custom_call.1} parent=0
    _
  %s6 = ssub.s32 1, %s4
  %s7 = scalar_select 0, %s6, %s4
  $region1: #{tpu_custom_call.1} parent=0
    #allocation2 [shape = 'u8[2048]{0}', space=vmem, size = 0x800, scoped, tag = 'output window, operand 0, single buffered']
    #allocation3 [shape = 's32[1]{0}', space=sflag, size = 0x4, scoped, tag = 'scoped memory for tpu_custom_call.1']
    %8 = vsyncpa [#allocation3], 0
    // Predicated region
    $region2: #{tpu_custom_call.1} parent=1 // pred_check
      _
    $region3: #{tpu_custom_call.1} parent=1 // pred_check_branch
      %10 = sbr.rel (0) target = $region5
    $region4: #{tpu_custom_call.1} parent=1 // pred_region
      _
    $region5: #{tpu_custom_call.1} parent=1 // pred_fallthru
      _
    // Predicated region
    $region6: #{tpu_custom_call.1} parent=1 // pred_check
      _
    $region7: #{tpu_custom_call.1} parent=1 // pred_check_branch
      %12 = sbr.rel (0) target = $region9
    $region8: #{tpu_custom_call.1} parent=1 // pred_region
      _
    $region9: #{tpu_custom_call.1} parent=1 // pred_fallthru
      _
    // Predicated region
    $region10: #{tpu_custom_call.1} parent=1 // pred_check
      _
    $region11: #{tpu_custom_call.1} parent=1 // pred_check_branch
      %14 = sbr.rel (0) target = $region13
    $region12: #{tpu_custom_call.1} parent=1 // pred_region
      _
    $region13: #{tpu_custom_call.1} parent=1 // pred_fallthru
      _
    %p15 = scmp.eq.s32.totalorder 0, 0
    // Predicated region
    $region14: #{tpu_custom_call.1} parent=1 // pred_check
      %p16 = pneg %p15
    $region15: #{tpu_custom_call.1} parent=1 // pred_check_branch
      %18 = sbr.rel (%p16) target = $region17
    $region16: #{tpu_custom_call.1} parent=1 // pred_region
      %v19 = vld [vmem:[%s2] sm:$0x1]
      %v21 = vlaneseq
      %v22 = vshrl.u32 %v21, 7
      %v23 = vsub.s32 0, %v22
      %v24 = vrot.slane %v19, %v23
      %vm26 = vcmask 60416
      %27 = vst.msk [vmem:[#allocation2] sm:$0xf] %vm26, %v24
    $region17: #{tpu_custom_call.1} parent=1 // pred_fallthru
      _
    %v28 = vld [vmem:[#allocation2] sm:$0xf]
    %v29 = vld [vmem:[%s0] sm:$0xf]
    %v30 = vld [vmem:[%s1] sm:$0xff]
    %v31 = vld [vmem:[%s1 + $0x8] sm:$0xff]
    %v32 = vld [vmem:[%s1 + $0x10] sm:$0xff]
    %v33 = vld [vmem:[%s1 + $0x18] sm:$0xff]
    %vm34 = vcmask 261120
    %v36 = vsel %vm34, %v29, 0
    %38 = vmatprep.subr.mxu0 0.0
    %39 = vmatpush1.msra.mxu0 %v30
    %40 = vmatprep.subr.mxu0 0.0
    %41 = vmatpush1.msra.mxu0 %v31
    %42 = vmatprep.subr.mxu0 0.0
    %43 = vmatpush1.msra.mxu0 %v32
    %44 = vmatprep.subr.mxu0 0.0
    %45 = vmatpush1.msra.mxu0 %v33
    %46 = vmatprep.subr.mxu0 0.0
    %47 = vmatpush1.msra.mxu0 0.0
    %48 = vmatprep.subr.mxu0 0.0
    %49 = vmatpush1.msra.mxu0 0.0
    %50 = vmatprep.subr.mxu0 0.0
    %51 = vmatpush1.msra.mxu0 0.0
    %52 = vmatprep.subr.mxu0 0.0
    %53 = vmatpush1.msra.mxu0 0.0
    %54 = vmatprep.subr.mxu0 0.0
    %55 = vmatpush1.msra.mxu0 0.0
    %56 = vmatprep.subr.mxu0 0.0
    %57 = vmatpush1.msra.mxu0 0.0
    %58 = vmatprep.subr.mxu0 0.0
    %59 = vmatpush1.msra.mxu0 0.0
    %60 = vmatprep.subr.mxu0 0.0
    %61 = vmatpush1.msra.mxu0 0.0
    %62 = vmatprep.subr.mxu0 0.0
    %63 = vmatpush1.msra.mxu0 0.0
    %64 = vmatprep.subr.mxu0 0.0
    %65 = vmatpush1.msra.mxu0 0.0
    %66 = vmatprep.subr.mxu0 0.0
    %67 = vmatpush1.msra.mxu0 0.0
    %68 = vmatprep.subr.mxu0 0.0
    %69 = vmatpush1.msra.mxu0 0.0
    %70 = vmatprep.subr.mxu0 0.0
    %71 = vmatpush1.msra.mxu0 0.0
    %72 = vmatprep.subr.mxu0 0.0
    %73 = vmatpush1.msra.mxu0 0.0
    %74 = vmatprep.subr.mxu0 0.0
    %75 = vmatpush1.msra.mxu0 0.0
    %76 = vmatprep.subr.mxu0 0.0
    %77 = vmatpush1.msra.mxu0 0.0
    %78 = vmatprep.subr.mxu0 0.0
    %79 = vmatpush1.msra.mxu0 0.0
    %80 = vmatprep.subr.mxu0 0.0
    %81 = vmatpush1.msra.mxu0 0.0
    %82 = vmatprep.subr.mxu0 0.0
    %83 = vmatpush1.msra.mxu0 0.0
    %84 = vmatprep.subr.mxu0 0.0
    %85 = vmatpush1.msra.mxu0 0.0
    %86 = vmatprep.subr.mxu0 0.0
    %87 = vmatpush1.msra.mxu0 0.0
    %88 = vmatprep.subr.mxu0 0.0
    %89 = vmatpush1.msra.mxu0 0.0
    %90 = vmatprep.subr.mxu0 0.0
    %91 = vmatpush1.msra.mxu0 0.0
    %92 = vmatprep.subr.mxu0 0.0
    %93 = vmatpush1.msra.mxu0 0.0
    %94 = vmatprep.subr.mxu0 0.0
    %95 = vmatpush1.msra.mxu0 0.0
    %96 = vmatprep.subr.mxu0 0.0
    %97 = vmatpush1.msra.mxu0 0.0
    %98 = vmatprep.subr.mxu0 0.0
    %99 = vmatpush1.msra.mxu0 0.0
    %100 = vmatprep.subr.mxu0 0.0
    %101 = vmatpush1.msra.mxu0 0.0
    %102 = vmatprep.mubr.f32.mxu0 0.0
    %103 = vmatmul.mubr.f32.gmra.mrb[0].mxu0 %v36
    %v104 = vpop.f32.mrb[0].mxu0
    %v105 = vadd.f32 0.0, %v104
    %v106 = vpop.f32.mrb[0].mxu0
    %107 = vdwg.mxu0
    %v108 = vadd.f32 %v28, %v105
    %vm109 = vcmask 60416
    %110 = vst.msk [vmem:[#allocation2] sm:$0xf] %vm109, %v108
    // Predicated region
    $region18: #{tpu_custom_call.1} parent=1 // pred_check
      _
    $region19: #{tpu_custom_call.1} parent=1 // pred_check_branch
      %112 = sbr.rel (0) target = $region21
    $region20: #{tpu_custom_call.1} parent=1 // pred_region
      %s114 = ssub.s32 64, 64
      %115 = vsyncadd [#allocation3], %s114
      %s117 = sshll.u32 [#allocation2], 4
      %s118 = int_to_ptr.vmem [resolvable:$true] %s117
      %120 = dma.vmem_to_hbm [thread:$0]  %s118, 64, %s3, [#allocation3]
    $region21: #{tpu_custom_call.1} parent=1 // pred_fallthru
      _
    // Predicated region
    $region22: #{tpu_custom_call.1} parent=1 // pred_check
      _
    $region23: #{tpu_custom_call.1} parent=1 // pred_check_branch
      %122 = sbr.rel (0) target = $region25
    $region24: #{tpu_custom_call.1} parent=1 // pred_region
      %123 = dma.done [#allocation3], 64
    $region25: #{tpu_custom_call.1} parent=1 // pred_fallthru
      _
    %124 = vsyncpa [#allocation3], 1

</llo_original>
